<compile_context>
chip_gen: v5e
topology: v5e:2x2
jax: 0.10.0
libtpu: 0.0.40
codegen_flags: <defaults>
</compile_context>

<pallas_src>
import functools

import jax
import jax.numpy as jnp
from jax.experimental import pallas as pl
from jax.experimental.pallas import tpu as pltpu

BN_EPS = 1e-5
PAD = 16      # every feature dim (2..12) is zero-padded to 16
LANES = 128   # lane-dense I/O slabs


# ----------------------------------------------------------------------------
# Kernel
# ----------------------------------------------------------------------------
def vae_kernel(xe_ref, w_ref, v_ref, out_ref):
    """xe_ref : (B, 128)     x in lanes 0:16, eps in lanes 16:32, rest 0
       w_ref  : (10, 16, 32) zero-padded weights stored (in, out); slot 4 is
                              the fused fc21|fc22 weight (cols 0:16 | 16:32)
       v_ref  : (19, 32)     gamma/beta rows for the 9 BN layers (cols 0:16)
                              plus the fused fc21|fc22 bias (row 8, 32-wide)
       out_ref: (B, 128)     recon lanes 0:16, mu 16:32, logvar 32:48, rest 0
    """
    B = xe_ref.shape[0]
    inv_b = 1.0 / B

    def lin(h16, widx):
        # (B,16) @ (16,32) on the MXU; padded rows/cols of W are zero, so the
        # padded lanes of the result stay exactly 0.
        return jnp.dot(h16, w_ref[widx], preferred_element_type=jnp.float32)

    def bn_relu(h32, vidx, apply_relu=True):
        """Training-mode BatchNorm1d (biased batch variance, eps=1e-5) with a
        single fused cross-sublane reduction and fused affine, then ReLU."""
        h = h32[:, :PAD]                                     # (B, 16)
        both = jnp.concatenate([h, h * h], axis=-1)          # (B, 32) one vreg
        s = jnp.sum(both, axis=0, keepdims=True) * inv_b     # one XLU reduce
        mean = s[:, :PAD]
        var = jnp.maximum(s[:, PAD:] - mean * mean, 0.0)     # clamp: no NaN
        scale = v_ref[vidx:vidx + 1, :PAD] * jax.lax.rsqrt(var + BN_EPS)
        out = (h - mean) * scale + v_ref[vidx + 1:vidx + 2, :PAD]
        return jnp.maximum(out, 0.0) if apply_relu else out

    x = xe_ref[:, :PAD]              # (B, 16), cols [0, D) valid
    eps = xe_ref[:, PAD:2 * PAD]     # (B, 16), cols [0, L) valid

    # ---- encode ----
    h = bn_relu(lin(x, 0), 0)        # linear1 + lin_bn1 + relu
    h = bn_relu(lin(h, 1), 2)        # linear2 + lin_bn2 + relu
    h = bn_relu(lin(h, 2), 4)        # linear3 + lin_bn3 + relu
    h = bn_relu(lin(h, 3), 6)        # fc1     + bn1     + relu
    mulv = lin(h, 4) + v_ref[8:9, :]                 # fused fc21|fc22 (B, 32)
    mu = mulv[:, :PAD]
    logvar = mulv[:, PAD:]

    # ---- reparameterize (training mode, deterministic eps input) ----
    z = eps * jnp.exp(0.5 * logvar) + mu

    # ---- decode ----
    h = bn_relu(lin(z, 5), 9)        # fc3     + fc_bn3  + relu
    h = bn_relu(lin(h, 6), 11)       # fc4     + fc_bn4  + relu
    h = bn_relu(lin(h, 7), 13)       # linear4 + lin_bn4 + relu
    h = bn_relu(lin(h, 8), 15)       # linear5 + lin_bn5 + relu
    recon = bn_relu(lin(h, 9), 17, apply_relu=False)  # linear6 + lin_bn6

    # Single unmasked lane-dense store.
    out_ref[...] = jnp.concatenate(
        [recon, mulv, jnp.zeros((B, LANES - 3 * PAD), jnp.float32)], axis=-1)


# ----------------------------------------------------------------------------
# Host-side packing (done ONCE, not per call)
# ----------------------------------------------------------------------------
def pack_params(params):
    """Pack the 40-array PyTorch-ordered parameter list into two buffers:
         W_all: (10, 16, 32)  zero-padded weights stored (in, out); slot 4 is
                              the fused fc21|fc22 weight.
         V_all: (19, 32)      gamma/beta per BN layer (cols 0:16) + fused bias.
    Biases of linears feeding a BatchNorm are dropped (mathematically exact).
    Accepts vectors shaped (dout,) or (1, dout)."""
    it = iter(params)

    def pad_w(w, col_off=0):
        out = jnp.zeros((PAD, 2 * PAD), jnp.float32)
        return out.at[:w.shape[0], col_off:col_off + w.shape[1]].set(w)

    def pad_v(v, col_off=0):
        v = jnp.asarray(v, jnp.float32).reshape(-1)
        out = jnp.zeros((2 * PAD,), jnp.float32)
        return out.at[col_off:col_off + v.shape[0]].set(v)

    w_rows, v_rows = [], []

    # linear1/lin_bn1, linear2/lin_bn2, linear3/lin_bn3, fc1/bn1
    for _ in range(4):
        w, _b, g, beta = next(it), next(it), next(it), next(it)
        w_rows.append(pad_w(w))
        v_rows.append(pad_v(g))
        v_rows.append(pad_v(beta))

    # fused fc21 | fc22
    w21, b21 = next(it), next(it)
    w22, b22 = next(it), next(it)
    w_rows.append(pad_w(w21) + pad_w(w22, col_off=PAD))
    v_rows.append(pad_v(b21) + pad_v(b22, col_off=PAD))

    # fc3/fc_bn3, fc4/fc_bn4, linear4/lin_bn4, linear5/lin_bn5, linear6/lin_bn6
    for _ in range(5):
        w, _b, g, beta = next(it), next(it), next(it), next(it)
        w_rows.append(pad_w(w))
        v_rows.append(pad_v(g))
        v_rows.append(pad_v(beta))

    return jnp.stack(w_rows), jnp.stack(v_rows)


# ----------------------------------------------------------------------------
# Jitted forward (lightweight per-call path: pad+concat, kernel, slice)
# ----------------------------------------------------------------------------
def make_forward(dims):
    D, _H1, _H2, L = dims

    @jax.jit
    def fwd(x, eps, w_all, v_all):
        B = x.shape[0]
        xe = jnp.concatenate(
            [x.astype(jnp.float32),
             jnp.zeros((B, PAD - D), jnp.float32),
             eps.astype(jnp.float32),
             jnp.zeros((B, LANES - PAD - L), jnp.float32)], axis=-1)

        vmem = lambda: pl.BlockSpec(memory_space=pltpu.MemorySpace.VMEM)
        out = pl.pallas_call(
            vae_kernel,
            out_shape=jax.ShapeDtypeStruct((B, LANES), jnp.float32),
            in_specs=[vmem(), vmem(), vmem()],
            out_specs=vmem(),
        )(xe, w_all, v_all)

        recon = out[:, :D]
        mu = out[:, PAD:PAD + L]
        logvar = out[:, 2 * PAD:2 * PAD + L]
        return recon, mu, logvar

    return fwd


# ----------------------------------------------------------------------------
# Deterministic synthetic parameters (PyTorch forward order; weights (in, out))
# ----------------------------------------------------------------------------
def make_params(key, dimensionality=2, architecture=(12, 6), latent=3):
    h1, h2 = architecture
    layer_dims = [
        (dimensionality, h1, True),   # linear1 + lin_bn1
        (h1, h2, True),               # linear2 + lin_bn2
        (h2, h2, True),               # linear3 + lin_bn3
        (h2, latent, True),           # fc1 + bn1
        (latent, latent, False),      # fc21
        (latent, latent, False),      # fc22
        (latent, latent, True),       # fc3 + fc_bn3
        (latent, h2, True),           # fc4 + fc_bn4
        (h2, h2, True),               # linear4 + lin_bn4
        (h2, h1, True),               # linear5 + lin_bn5
        (h1, dimensionality, True),   # linear6 + lin_bn6
    ]
    params = []
    for (din, dout, has_bn) in layer_dims:
        key, kw, kb, kg, kbt = jax.random.split(key, 5)
        bound = 1.0 / jnp.sqrt(din)
        w = jax.random.uniform(kw, (din, dout), jnp.float32, -bound, bound)
        b = jax.random.uniform(kb, (1, dout), jnp.float32, -bound, bound)
        params += [w, b]
        if has_bn:
            gamma = 1.0 + 0.1 * jax.random.normal(kg, (1, dout), jnp.float32)
            beta = 0.05 * jax.random.normal(kbt, (1, dout), jnp.float32)
            params += [gamma, beta]
    return params


# ----------------------------------------------------------------------------
# Pure-JAX reference of the PyTorch forward (keeps ALL linear biases)
# ----------------------------------------------------------------------------
def vae_reference(x, eps, params):
    def lin(h, w, b):
        return h @ w + b.reshape(1, -1)

    def bn(h, g, b):
        m = jnp.mean(h, axis=0, keepdims=True)
        v = jnp.mean(jnp.square(h - m), axis=0, keepdims=True)
        return (h - m) / jnp.sqrt(v + BN_EPS) * g.reshape(1, -1) + b.reshape(1, -1)

    relu = lambda h: jnp.maximum(h, 0.0)

    p = iter(params)
    w1, b1, g1, bb1 = next(p), next(p), next(p), next(p)
    w2, b2, g2, bb2 = next(p), next(p), next(p), next(p)
    w3, b3, g3, bb3 = next(p), next(p), next(p), next(p)
    wfc1, bfc1, gbn1, bbbn1 = next(p), next(p), next(p), next(p)
    wfc21, bfc21 = next(p), next(p)
    wfc22, bfc22 = next(p), next(p)
    wfc3, bfc3, gfb3, bfb3 = next(p), next(p), next(p), next(p)
    wfc4, bfc4, gfb4, bfb4 = next(p), next(p), next(p), next(p)
    w4, b4, g4, bb4 = next(p), next(p), next(p), next(p)
    w5, b5, g5, bb5 = next(p), next(p), next(p), next(p)
    w6, b6, g6, bb6 = next(p), next(p), next(p), next(p)

    lin1 = relu(bn(lin(x, w1, b1), g1, bb1))
    lin2 = relu(bn(lin(lin1, w2, b2), g2, bb2))
    lin3 = relu(bn(lin(lin2, w3, b3), g3, bb3))
    fc1 = relu(bn(lin(lin3, wfc1, bfc1), gbn1, bbbn1))
    mu = lin(fc1, wfc21, bfc21)
    logvar = lin(fc1, wfc22, bfc22)
    z = eps * jnp.exp(0.5 * logvar) + mu
    fc3 = relu(bn(lin(z, wfc3, bfc3), gfb3, bfb3))
    fc4 = relu(bn(lin(fc3, wfc4, bfc4), gfb4, bfb4))
    lin4 = relu(bn(lin(fc4, w4, b4), g4, bb4))
    lin5 = relu(bn(lin(lin4, w5, b5), g5, bb5))
    recon = bn(lin(lin5, w6, b6), g6, bb6)
    return recon, mu, logvar


if __name__ == "__main__":
    dimensionality = 2
    architecture = (12, 6)
    latent = 3
    batch = 8
    dims = (dimensionality, architecture[0], architecture[1], latent)

    key = jax.random.PRNGKey(0)
    kx, keps, kp = jax.random.split(key, 3)

    x = jax.random.normal(kx, (batch, dimensionality), jnp.float32)
    eps = jax.random.normal(keps, (batch, latent), jnp.float32)
    params = make_params(kp, dimensionality, architecture, latent)

    # Pack once (amortized over training); the per-call path is jitted.
    W_all, V_all = pack_params(params)
    forward = make_forward(dims)

    recon, mu, logvar = jax.block_until_ready(forward(x, eps, W_all, V_all))

    r_ref, mu_ref, lv_ref = vae_reference(x, eps, params)
    # Kernel drops pre-BN biases (exact), fuses fc21/fc22, and uses a one-pass
    # clamped variance, so allow fp-rounding-level differences.
    assert jnp.allclose(recon, r_ref, rtol=1e-3, atol=1e-3)
    assert jnp.allclose(mu, mu_ref, rtol=1e-3, atol=1e-3)
    assert jnp.allclose(logvar, lv_ref, rtol=1e-3, atol=1e-3)

    print("KERNEL_OK")
</pallas_src>

<mosaic_0001>
module attributes {stable_mosaic.version = 11 : i64} {
  func.func @vae_kernel(%arg0: memref<8x128xf32, #tpu.memory_space<vmem>>, %arg1: memref<10x16x32xf32, #tpu.memory_space<vmem>>, %arg2: memref<19x32xf32, #tpu.memory_space<vmem>>, %arg3: memref<8x128xf32, #tpu.memory_space<vmem>>) attributes {dimension_semantics = [], scalar_prefetch = 0 : i64, scratch_operands = 0 : i64, tpu.core_type = #tpu.core_type<tc>} {
    %c0 = arith.constant 0 : index
    %c0_0 = arith.constant 0 : index
    %0 = vector.load %arg0[%c0, %c0_0] : memref<8x128xf32, #tpu.memory_space<vmem>>, vector<8x16xf32>
    %c0_1 = arith.constant 0 : index
    %c16 = arith.constant 16 : index
    %1 = vector.load %arg0[%c0_1, %c16] : memref<8x128xf32, #tpu.memory_space<vmem>>, vector<8x16xf32>
    %c0_2 = arith.constant 0 : index
    %c0_3 = arith.constant 0 : index
    %c0_4 = arith.constant 0 : index
    %2 = vector.load %arg1[%c0_2, %c0_3, %c0_4] : memref<10x16x32xf32, #tpu.memory_space<vmem>>, vector<1x16x32xf32>
    %3 = vector.shape_cast %2 : vector<1x16x32xf32> to vector<16x32xf32>
    %cst = arith.constant dense<0.000000e+00> : vector<8x32xf32>
    %4 = tpu.matmul %0, %3, %cst {dimension_numbers = #tpu.dot_dimension_numbers<[1], [0], [0], [1], [0, 0, 1, 1], [], []>} : vector<8x16xf32>, vector<16x32xf32>, vector<8x32xf32> -> vector<8x32xf32>
    %5 = vector.extract_strided_slice %4 {offsets = [0, 0], sizes = [8, 16], strides = [1, 1]} : vector<8x32xf32> to vector<8x16xf32>
    %6 = arith.mulf %5, %5 : vector<8x16xf32>
    %7 = tpu.concatenate %5, %6 in 1 : vector<8x16xf32>, vector<8x16xf32> -> vector<8x32xf32>
    %cst_5 = arith.constant dense<0.000000e+00> : vector<32xf32>
    %8 = vector.multi_reduction <add>, %7, %cst_5 [0] : vector<8x32xf32> to vector<32xf32>
    %9 = vector.shape_cast %8 : vector<32xf32> to vector<1x32xf32>
    %cst_6 = arith.constant 1.250000e-01 : f32
    %10 = vector.broadcast %cst_6 : f32 to vector<1x32xf32>
    %11 = arith.mulf %9, %10 : vector<1x32xf32>
    %12 = vector.extract_strided_slice %11 {offsets = [0, 0], sizes = [1, 16], strides = [1, 1]} : vector<1x32xf32> to vector<1x16xf32>
    %13 = vector.extract_strided_slice %11 {offsets = [0, 16], sizes = [1, 16], strides = [1, 1]} : vector<1x32xf32> to vector<1x16xf32>
    %14 = arith.mulf %12, %12 : vector<1x16xf32>
    %15 = arith.subf %13, %14 : vector<1x16xf32>
    %cst_7 = arith.constant 0.000000e+00 : f32
    %16 = vector.broadcast %cst_7 : f32 to vector<1x16xf32>
    %17 = arith.maximumf %15, %16 : vector<1x16xf32>
    %c0_8 = arith.constant 0 : index
    %c0_9 = arith.constant 0 : index
    %18 = vector.load %arg2[%c0_8, %c0_9] : memref<19x32xf32, #tpu.memory_space<vmem>>, vector<1x16xf32>
    %cst_10 = arith.constant 9.99999974E-6 : f32
    %19 = vector.broadcast %cst_10 : f32 to vector<1x16xf32>
    %20 = arith.addf %17, %19 : vector<1x16xf32>
    %21 = math.rsqrt %20 : vector<1x16xf32>
    %22 = arith.mulf %18, %21 : vector<1x16xf32>
    %23 = vector.broadcast %12 : vector<1x16xf32> to vector<8x16xf32>
    %24 = arith.subf %5, %23 : vector<8x16xf32>
    %25 = vector.broadcast %22 : vector<1x16xf32> to vector<8x16xf32>
    %26 = arith.mulf %24, %25 : vector<8x16xf32>
    %c1 = arith.constant 1 : index
    %c0_11 = arith.constant 0 : index
    %27 = vector.load %arg2[%c1, %c0_11] : memref<19x32xf32, #tpu.memory_space<vmem>>, vector<1x16xf32>
    %28 = vector.broadcast %27 : vector<1x16xf32> to vector<8x16xf32>
    %29 = arith.addf %26, %28 : vector<8x16xf32>
    %cst_12 = arith.constant 0.000000e+00 : f32
    %30 = vector.broadcast %cst_12 : f32 to vector<8x16xf32>
    %31 = arith.maximumf %29, %30 : vector<8x16xf32>
    %c1_13 = arith.constant 1 : index
    %c0_14 = arith.constant 0 : index
    %c0_15 = arith.constant 0 : index
    %32 = vector.load %arg1[%c1_13, %c0_14, %c0_15] : memref<10x16x32xf32, #tpu.memory_space<vmem>>, vector<1x16x32xf32>
    %33 = vector.shape_cast %32 : vector<1x16x32xf32> to vector<16x32xf32>
    %cst_16 = arith.constant dense<0.000000e+00> : vector<8x32xf32>
    %34 = tpu.matmul %31, %33, %cst_16 {dimension_numbers = #tpu.dot_dimension_numbers<[1], [0], [0], [1], [0, 0, 1, 1], [], []>} : vector<8x16xf32>, vector<16x32xf32>, vector<8x32xf32> -> vector<8x32xf32>
    %35 = vector.extract_strided_slice %34 {offsets = [0, 0], sizes = [8, 16], strides = [1, 1]} : vector<8x32xf32> to vector<8x16xf32>
    %36 = arith.mulf %35, %35 : vector<8x16xf32>
    %37 = tpu.concatenate %35, %36 in 1 : vector<8x16xf32>, vector<8x16xf32> -> vector<8x32xf32>
    %cst_17 = arith.constant dense<0.000000e+00> : vector<32xf32>
    %38 = vector.multi_reduction <add>, %37, %cst_17 [0] : vector<8x32xf32> to vector<32xf32>
    %39 = vector.shape_cast %38 : vector<32xf32> to vector<1x32xf32>
    %cst_18 = arith.constant 1.250000e-01 : f32
    %40 = vector.broadcast %cst_18 : f32 to vector<1x32xf32>
    %41 = arith.mulf %39, %40 : vector<1x32xf32>
    %42 = vector.extract_strided_slice %41 {offsets = [0, 0], sizes = [1, 16], strides = [1, 1]} : vector<1x32xf32> to vector<1x16xf32>
    %43 = vector.extract_strided_slice %41 {offsets = [0, 16], sizes = [1, 16], strides = [1, 1]} : vector<1x32xf32> to vector<1x16xf32>
    %44 = arith.mulf %42, %42 : vector<1x16xf32>
    %45 = arith.subf %43, %44 : vector<1x16xf32>
    %cst_19 = arith.constant 0.000000e+00 : f32
    %46 = vector.broadcast %cst_19 : f32 to vector<1x16xf32>
    %47 = arith.maximumf %45, %46 : vector<1x16xf32>
    %c2 = arith.constant 2 : index
    %c0_20 = arith.constant 0 : index
    %48 = vector.load %arg2[%c2, %c0_20] : memref<19x32xf32, #tpu.memory_space<vmem>>, vector<1x16xf32>
    %cst_21 = arith.constant 9.99999974E-6 : f32
    %49 = vector.broadcast %cst_21 : f32 to vector<1x16xf32>
    %50 = arith.addf %47, %49 : vector<1x16xf32>
    %51 = math.rsqrt %50 : vector<1x16xf32>
    %52 = arith.mulf %48, %51 : vector<1x16xf32>
    %53 = vector.broadcast %42 : vector<1x16xf32> to vector<8x16xf32>
    %54 = arith.subf %35, %53 : vector<8x16xf32>
    %55 = vector.broadcast %52 : vector<1x16xf32> to vector<8x16xf32>
    %56 = arith.mulf %54, %55 : vector<8x16xf32>
    %c3 = arith.constant 3 : index
    %c0_22 = arith.constant 0 : index
    %57 = vector.load %arg2[%c3, %c0_22] : memref<19x32xf32, #tpu.memory_space<vmem>>, vector<1x16xf32>
    %58 = vector.broadcast %57 : vector<1x16xf32> to vector<8x16xf32>
    %59 = arith.addf %56, %58 : vector<8x16xf32>
    %cst_23 = arith.constant 0.000000e+00 : f32
    %60 = vector.broadcast %cst_23 : f32 to vector<8x16xf32>
    %61 = arith.maximumf %59, %60 : vector<8x16xf32>
    %c2_24 = arith.constant 2 : index
    %c0_25 = arith.constant 0 : index
    %c0_26 = arith.constant 0 : index
    %62 = vector.load %arg1[%c2_24, %c0_25, %c0_26] : memref<10x16x32xf32, #tpu.memory_space<vmem>>, vector<1x16x32xf32>
    %63 = vector.shape_cast %62 : vector<1x16x32xf32> to vector<16x32xf32>
    %cst_27 = arith.constant dense<0.000000e+00> : vector<8x32xf32>
    %64 = tpu.matmul %61, %63, %cst_27 {dimension_numbers = #tpu.dot_dimension_numbers<[1], [0], [0], [1], [0, 0, 1, 1], [], []>} : vector<8x16xf32>, vector<16x32xf32>, vector<8x32xf32> -> vector<8x32xf32>
    %65 = vector.extract_strided_slice %64 {offsets = [0, 0], sizes = [8, 16], strides = [1, 1]} : vector<8x32xf32> to vector<8x16xf32>
    %66 = arith.mulf %65, %65 : vector<8x16xf32>
    %67 = tpu.concatenate %65, %66 in 1 : vector<8x16xf32>, vector<8x16xf32> -> vector<8x32xf32>
    %cst_28 = arith.constant dense<0.000000e+00> : vector<32xf32>
    %68 = vector.multi_reduction <add>, %67, %cst_28 [0] : vector<8x32xf32> to vector<32xf32>
    %69 = vector.shape_cast %68 : vector<32xf32> to vector<1x32xf32>
    %cst_29 = arith.constant 1.250000e-01 : f32
    %70 = vector.broadcast %cst_29 : f32 to vector<1x32xf32>
    %71 = arith.mulf %69, %70 : vector<1x32xf32>
    %72 = vector.extract_strided_slice %71 {offsets = [0, 0], sizes = [1, 16], strides = [1, 1]} : vector<1x32xf32> to vector<1x16xf32>
    %73 = vector.extract_strided_slice %71 {offsets = [0, 16], sizes = [1, 16], strides = [1, 1]} : vector<1x32xf32> to vector<1x16xf32>
    %74 = arith.mulf %72, %72 : vector<1x16xf32>
    %75 = arith.subf %73, %74 : vector<1x16xf32>
    %cst_30 = arith.constant 0.000000e+00 : f32
    %76 = vector.broadcast %cst_30 : f32 to vector<1x16xf32>
    %77 = arith.maximumf %75, %76 : vector<1x16xf32>
    %c4 = arith.constant 4 : index
    %c0_31 = arith.constant 0 : index
    %78 = vector.load %arg2[%c4, %c0_31] : memref<19x32xf32, #tpu.memory_space<vmem>>, vector<1x16xf32>
    %cst_32 = arith.constant 9.99999974E-6 : f32
    %79 = vector.broadcast %cst_32 : f32 to vector<1x16xf32>
    %80 = arith.addf %77, %79 : vector<1x16xf32>
    %81 = math.rsqrt %80 : vector<1x16xf32>
    %82 = arith.mulf %78, %81 : vector<1x16xf32>
    %83 = vector.broadcast %72 : vector<1x16xf32> to vector<8x16xf32>
    %84 = arith.subf %65, %83 : vector<8x16xf32>
    %85 = vector.broadcast %82 : vector<1x16xf32> to vector<8x16xf32>
    %86 = arith.mulf %84, %85 : vector<8x16xf32>
    %c5 = arith.constant 5 : index
    %c0_33 = arith.constant 0 : index
    %87 = vector.load %arg2[%c5, %c0_33] : memref<19x32xf32, #tpu.memory_space<vmem>>, vector<1x16xf32>
    %88 = vector.broadcast %87 : vector<1x16xf32> to vector<8x16xf32>
    %89 = arith.addf %86, %88 : vector<8x16xf32>
    %cst_34 = arith.constant 0.000000e+00 : f32
    %90 = vector.broadcast %cst_34 : f32 to vector<8x16xf32>
    %91 = arith.maximumf %89, %90 : vector<8x16xf32>
    %c3_35 = arith.constant 3 : index
    %c0_36 = arith.constant 0 : index
    %c0_37 = arith.constant 0 : index
    %92 = vector.load %arg1[%c3_35, %c0_36, %c0_37] : memref<10x16x32xf32, #tpu.memory_space<vmem>>, vector<1x16x32xf32>
    %93 = vector.shape_cast %92 : vector<1x16x32xf32> to vector<16x32xf32>
    %cst_38 = arith.constant dense<0.000000e+00> : vector<8x32xf32>
    %94 = tpu.matmul %91, %93, %cst_38 {dimension_numbers = #tpu.dot_dimension_numbers<[1], [0], [0], [1], [0, 0, 1, 1], [], []>} : vector<8x16xf32>, vector<16x32xf32>, vector<8x32xf32> -> vector<8x32xf32>
    %95 = vector.extract_strided_slice %94 {offsets = [0, 0], sizes = [8, 16], strides = [1, 1]} : vector<8x32xf32> to vector<8x16xf32>
    %96 = arith.mulf %95, %95 : vector<8x16xf32>
    %97 = tpu.concatenate %95, %96 in 1 : vector<8x16xf32>, vector<8x16xf32> -> vector<8x32xf32>
    %cst_39 = arith.constant dense<0.000000e+00> : vector<32xf32>
    %98 = vector.multi_reduction <add>, %97, %cst_39 [0] : vector<8x32xf32> to vector<32xf32>
    %99 = vector.shape_cast %98 : vector<32xf32> to vector<1x32xf32>
    %cst_40 = arith.constant 1.250000e-01 : f32
    %100 = vector.broadcast %cst_40 : f32 to vector<1x32xf32>
    %101 = arith.mulf %99, %100 : vector<1x32xf32>
    %102 = vector.extract_strided_slice %101 {offsets = [0, 0], sizes = [1, 16], strides = [1, 1]} : vector<1x32xf32> to vector<1x16xf32>
    %103 = vector.extract_strided_slice %101 {offsets = [0, 16], sizes = [1, 16], strides = [1, 1]} : vector<1x32xf32> to vector<1x16xf32>
    %104 = arith.mulf %102, %102 : vector<1x16xf32>
    %105 = arith.subf %103, %104 : vector<1x16xf32>
    %cst_41 = arith.constant 0.000000e+00 : f32
    %106 = vector.broadcast %cst_41 : f32 to vector<1x16xf32>
    %107 = arith.maximumf %105, %106 : vector<1x16xf32>
    %c6 = arith.constant 6 : index
    %c0_42 = arith.constant 0 : index
    %108 = vector.load %arg2[%c6, %c0_42] : memref<19x32xf32, #tpu.memory_space<vmem>>, vector<1x16xf32>
    %cst_43 = arith.constant 9.99999974E-6 : f32
    %109 = vector.broadcast %cst_43 : f32 to vector<1x16xf32>
    %110 = arith.addf %107, %109 : vector<1x16xf32>
    %111 = math.rsqrt %110 : vector<1x16xf32>
    %112 = arith.mulf %108, %111 : vector<1x16xf32>
    %113 = vector.broadcast %102 : vector<1x16xf32> to vector<8x16xf32>
    %114 = arith.subf %95, %113 : vector<8x16xf32>
    %115 = vector.broadcast %112 : vector<1x16xf32> to vector<8x16xf32>
    %116 = arith.mulf %114, %115 : vector<8x16xf32>
    %c7 = arith.constant 7 : index
    %c0_44 = arith.constant 0 : index
    %117 = vector.load %arg2[%c7, %c0_44] : memref<19x32xf32, #tpu.memory_space<vmem>>, vector<1x16xf32>
    %118 = vector.broadcast %117 : vector<1x16xf32> to vector<8x16xf32>
    %119 = arith.addf %116, %118 : vector<8x16xf32>
    %cst_45 = arith.constant 0.000000e+00 : f32
    %120 = vector.broadcast %cst_45 : f32 to vector<8x16xf32>
    %121 = arith.maximumf %119, %120 : vector<8x16xf32>
    %c4_46 = arith.constant 4 : index
    %c0_47 = arith.constant 0 : index
    %c0_48 = arith.constant 0 : index
    %122 = vector.load %arg1[%c4_46, %c0_47, %c0_48] : memref<10x16x32xf32, #tpu.memory_space<vmem>>, vector<1x16x32xf32>
    %123 = vector.shape_cast %122 : vector<1x16x32xf32> to vector<16x32xf32>
    %cst_49 = arith.constant dense<0.000000e+00> : vector<8x32xf32>
    %124 = tpu.matmul %121, %123, %cst_49 {dimension_numbers = #tpu.dot_dimension_numbers<[1], [0], [0], [1], [0, 0, 1, 1], [], []>} : vector<8x16xf32>, vector<16x32xf32>, vector<8x32xf32> -> vector<8x32xf32>
    %c8 = arith.constant 8 : index
    %c0_50 = arith.constant 0 : index
    %125 = vector.load %arg2[%c8, %c0_50] : memref<19x32xf32, #tpu.memory_space<vmem>>, vector<1x32xf32>
    %126 = vector.broadcast %125 : vector<1x32xf32> to vector<8x32xf32>
    %127 = arith.addf %124, %126 : vector<8x32xf32>
    %128 = vector.extract_strided_slice %127 {offsets = [0, 0], sizes = [8, 16], strides = [1, 1]} : vector<8x32xf32> to vector<8x16xf32>
    %129 = vector.extract_strided_slice %127 {offsets = [0, 16], sizes = [8, 16], strides = [1, 1]} : vector<8x32xf32> to vector<8x16xf32>
    %cst_51 = arith.constant 5.000000e-01 : f32
    %130 = vector.broadcast %cst_51 : f32 to vector<8x16xf32>
    %131 = arith.mulf %130, %129 : vector<8x16xf32>
    %132 = math.exp %131 : vector<8x16xf32>
    %133 = arith.mulf %1, %132 : vector<8x16xf32>
    %134 = arith.addf %133, %128 : vector<8x16xf32>
    %c5_52 = arith.constant 5 : index
    %c0_53 = arith.constant 0 : index
    %c0_54 = arith.constant 0 : index
    %135 = vector.load %arg1[%c5_52, %c0_53, %c0_54] : memref<10x16x32xf32, #tpu.memory_space<vmem>>, vector<1x16x32xf32>
    %136 = vector.shape_cast %135 : vector<1x16x32xf32> to vector<16x32xf32>
    %cst_55 = arith.constant dense<0.000000e+00> : vector<8x32xf32>
    %137 = tpu.matmul %134, %136, %cst_55 {dimension_numbers = #tpu.dot_dimension_numbers<[1], [0], [0], [1], [0, 0, 1, 1], [], []>} : vector<8x16xf32>, vector<16x32xf32>, vector<8x32xf32> -> vector<8x32xf32>
    %138 = vector.extract_strided_slice %137 {offsets = [0, 0], sizes = [8, 16], strides = [1, 1]} : vector<8x32xf32> to vector<8x16xf32>
    %139 = arith.mulf %138, %138 : vector<8x16xf32>
    %140 = tpu.concatenate %138, %139 in 1 : vector<8x16xf32>, vector<8x16xf32> -> vector<8x32xf32>
    %cst_56 = arith.constant dense<0.000000e+00> : vector<32xf32>
    %141 = vector.multi_reduction <add>, %140, %cst_56 [0] : vector<8x32xf32> to vector<32xf32>
    %142 = vector.shape_cast %141 : vector<32xf32> to vector<1x32xf32>
    %cst_57 = arith.constant 1.250000e-01 : f32
    %143 = vector.broadcast %cst_57 : f32 to vector<1x32xf32>
    %144 = arith.mulf %142, %143 : vector<1x32xf32>
    %145 = vector.extract_strided_slice %144 {offsets = [0, 0], sizes = [1, 16], strides = [1, 1]} : vector<1x32xf32> to vector<1x16xf32>
    %146 = vector.extract_strided_slice %144 {offsets = [0, 16], sizes = [1, 16], strides = [1, 1]} : vector<1x32xf32> to vector<1x16xf32>
    %147 = arith.mulf %145, %145 : vector<1x16xf32>
    %148 = arith.subf %146, %147 : vector<1x16xf32>
    %cst_58 = arith.constant 0.000000e+00 : f32
    %149 = vector.broadcast %cst_58 : f32 to vector<1x16xf32>
    %150 = arith.maximumf %148, %149 : vector<1x16xf32>
    %c9 = arith.constant 9 : index
    %c0_59 = arith.constant 0 : index
    %151 = vector.load %arg2[%c9, %c0_59] : memref<19x32xf32, #tpu.memory_space<vmem>>, vector<1x16xf32>
    %cst_60 = arith.constant 9.99999974E-6 : f32
    %152 = vector.broadcast %cst_60 : f32 to vector<1x16xf32>
    %153 = arith.addf %150, %152 : vector<1x16xf32>
    %154 = math.rsqrt %153 : vector<1x16xf32>
    %155 = arith.mulf %151, %154 : vector<1x16xf32>
    %156 = vector.broadcast %145 : vector<1x16xf32> to vector<8x16xf32>
    %157 = arith.subf %138, %156 : vector<8x16xf32>
    %158 = vector.broadcast %155 : vector<1x16xf32> to vector<8x16xf32>
    %159 = arith.mulf %157, %158 : vector<8x16xf32>
    %c10 = arith.constant 10 : index
    %c0_61 = arith.constant 0 : index
    %160 = vector.load %arg2[%c10, %c0_61] : memref<19x32xf32, #tpu.memory_space<vmem>>, vector<1x16xf32>
    %161 = vector.broadcast %160 : vector<1x16xf32> to vector<8x16xf32>
    %162 = arith.addf %159, %161 : vector<8x16xf32>
    %cst_62 = arith.constant 0.000000e+00 : f32
    %163 = vector.broadcast %cst_62 : f32 to vector<8x16xf32>
    %164 = arith.maximumf %162, %163 : vector<8x16xf32>
    %c6_63 = arith.constant 6 : index
    %c0_64 = arith.constant 0 : index
    %c0_65 = arith.constant 0 : index
    %165 = vector.load %arg1[%c6_63, %c0_64, %c0_65] : memref<10x16x32xf32, #tpu.memory_space<vmem>>, vector<1x16x32xf32>
    %166 = vector.shape_cast %165 : vector<1x16x32xf32> to vector<16x32xf32>
    %cst_66 = arith.constant dense<0.000000e+00> : vector<8x32xf32>
    %167 = tpu.matmul %164, %166, %cst_66 {dimension_numbers = #tpu.dot_dimension_numbers<[1], [0], [0], [1], [0, 0, 1, 1], [], []>} : vector<8x16xf32>, vector<16x32xf32>, vector<8x32xf32> -> vector<8x32xf32>
    %168 = vector.extract_strided_slice %167 {offsets = [0, 0], sizes = [8, 16], strides = [1, 1]} : vector<8x32xf32> to vector<8x16xf32>
    %169 = arith.mulf %168, %168 : vector<8x16xf32>
    %170 = tpu.concatenate %168, %169 in 1 : vector<8x16xf32>, vector<8x16xf32> -> vector<8x32xf32>
    %cst_67 = arith.constant dense<0.000000e+00> : vector<32xf32>
    %171 = vector.multi_reduction <add>, %170, %cst_67 [0] : vector<8x32xf32> to vector<32xf32>
    %172 = vector.shape_cast %171 : vector<32xf32> to vector<1x32xf32>
    %cst_68 = arith.constant 1.250000e-01 : f32
    %173 = vector.broadcast %cst_68 : f32 to vector<1x32xf32>
    %174 = arith.mulf %172, %173 : vector<1x32xf32>
    %175 = vector.extract_strided_slice %174 {offsets = [0, 0], sizes = [1, 16], strides = [1, 1]} : vector<1x32xf32> to vector<1x16xf32>
    %176 = vector.extract_strided_slice %174 {offsets = [0, 16], sizes = [1, 16], strides = [1, 1]} : vector<1x32xf32> to vector<1x16xf32>
    %177 = arith.mulf %175, %175 : vector<1x16xf32>
    %178 = arith.subf %176, %177 : vector<1x16xf32>
    %cst_69 = arith.constant 0.000000e+00 : f32
    %179 = vector.broadcast %cst_69 : f32 to vector<1x16xf32>
    %180 = arith.maximumf %178, %179 : vector<1x16xf32>
    %c11 = arith.constant 11 : index
    %c0_70 = arith.constant 0 : index
    %181 = vector.load %arg2[%c11, %c0_70] : memref<19x32xf32, #tpu.memory_space<vmem>>, vector<1x16xf32>
    %cst_71 = arith.constant 9.99999974E-6 : f32
    %182 = vector.broadcast %cst_71 : f32 to vector<1x16xf32>
    %183 = arith.addf %180, %182 : vector<1x16xf32>
    %184 = math.rsqrt %183 : vector<1x16xf32>
    %185 = arith.mulf %181, %184 : vector<1x16xf32>
    %186 = vector.broadcast %175 : vector<1x16xf32> to vector<8x16xf32>
    %187 = arith.subf %168, %186 : vector<8x16xf32>
    %188 = vector.broadcast %185 : vector<1x16xf32> to vector<8x16xf32>
    %189 = arith.mulf %187, %188 : vector<8x16xf32>
    %c12 = arith.constant 12 : index
    %c0_72 = arith.constant 0 : index
    %190 = vector.load %arg2[%c12, %c0_72] : memref<19x32xf32, #tpu.memory_space<vmem>>, vector<1x16xf32>
    %191 = vector.broadcast %190 : vector<1x16xf32> to vector<8x16xf32>
    %192 = arith.addf %189, %191 : vector<8x16xf32>
    %cst_73 = arith.constant 0.000000e+00 : f32
    %193 = vector.broadcast %cst_73 : f32 to vector<8x16xf32>
    %194 = arith.maximumf %192, %193 : vector<8x16xf32>
    %c7_74 = arith.constant 7 : index
    %c0_75 = arith.constant 0 : index
    %c0_76 = arith.constant 0 : index
    %195 = vector.load %arg1[%c7_74, %c0_75, %c0_76] : memref<10x16x32xf32, #tpu.memory_space<vmem>>, vector<1x16x32xf32>
    %196 = vector.shape_cast %195 : vector<1x16x32xf32> to vector<16x32xf32>
    %cst_77 = arith.constant dense<0.000000e+00> : vector<8x32xf32>
    %197 = tpu.matmul %194, %196, %cst_77 {dimension_numbers = #tpu.dot_dimension_numbers<[1], [0], [0], [1], [0, 0, 1, 1], [], []>} : vector<8x16xf32>, vector<16x32xf32>, vector<8x32xf32> -> vector<8x32xf32>
    %198 = vector.extract_strided_slice %197 {offsets = [0, 0], sizes = [8, 16], strides = [1, 1]} : vector<8x32xf32> to vector<8x16xf32>
    %199 = arith.mulf %198, %198 : vector<8x16xf32>
    %200 = tpu.concatenate %198, %199 in 1 : vector<8x16xf32>, vector<8x16xf32> -> vector<8x32xf32>
    %cst_78 = arith.constant dense<0.000000e+00> : vector<32xf32>
    %201 = vector.multi_reduction <add>, %200, %cst_78 [0] : vector<8x32xf32> to vector<32xf32>
    %202 = vector.shape_cast %201 : vector<32xf32> to vector<1x32xf32>
    %cst_79 = arith.constant 1.250000e-01 : f32
    %203 = vector.broadcast %cst_79 : f32 to vector<1x32xf32>
    %204 = arith.mulf %202, %203 : vector<1x32xf32>
    %205 = vector.extract_strided_slice %204 {offsets = [0, 0], sizes = [1, 16], strides = [1, 1]} : vector<1x32xf32> to vector<1x16xf32>
    %206 = vector.extract_strided_slice %204 {offsets = [0, 16], sizes = [1, 16], strides = [1, 1]} : vector<1x32xf32> to vector<1x16xf32>
    %207 = arith.mulf %205, %205 : vector<1x16xf32>
    %208 = arith.subf %206, %207 : vector<1x16xf32>
    %cst_80 = arith.constant 0.000000e+00 : f32
    %209 = vector.broadcast %cst_80 : f32 to vector<1x16xf32>
    %210 = arith.maximumf %208, %209 : vector<1x16xf32>
    %c13 = arith.constant 13 : index
    %c0_81 = arith.constant 0 : index
    %211 = vector.load %arg2[%c13, %c0_81] : memref<19x32xf32, #tpu.memory_space<vmem>>, vector<1x16xf32>
    %cst_82 = arith.constant 9.99999974E-6 : f32
    %212 = vector.broadcast %cst_82 : f32 to vector<1x16xf32>
    %213 = arith.addf %210, %212 : vector<1x16xf32>
    %214 = math.rsqrt %213 : vector<1x16xf32>
    %215 = arith.mulf %211, %214 : vector<1x16xf32>
    %216 = vector.broadcast %205 : vector<1x16xf32> to vector<8x16xf32>
    %217 = arith.subf %198, %216 : vector<8x16xf32>
    %218 = vector.broadcast %215 : vector<1x16xf32> to vector<8x16xf32>
    %219 = arith.mulf %217, %218 : vector<8x16xf32>
    %c14 = arith.constant 14 : index
    %c0_83 = arith.constant 0 : index
    %220 = vector.load %arg2[%c14, %c0_83] : memref<19x32xf32, #tpu.memory_space<vmem>>, vector<1x16xf32>
    %221 = vector.broadcast %220 : vector<1x16xf32> to vector<8x16xf32>
    %222 = arith.addf %219, %221 : vector<8x16xf32>
    %cst_84 = arith.constant 0.000000e+00 : f32
    %223 = vector.broadcast %cst_84 : f32 to vector<8x16xf32>
    %224 = arith.maximumf %222, %223 : vector<8x16xf32>
    %c8_85 = arith.constant 8 : index
    %c0_86 = arith.constant 0 : index
    %c0_87 = arith.constant 0 : index
    %225 = vector.load %arg1[%c8_85, %c0_86, %c0_87] : memref<10x16x32xf32, #tpu.memory_space<vmem>>, vector<1x16x32xf32>
    %226 = vector.shape_cast %225 : vector<1x16x32xf32> to vector<16x32xf32>
    %cst_88 = arith.constant dense<0.000000e+00> : vector<8x32xf32>
    %227 = tpu.matmul %224, %226, %cst_88 {dimension_numbers = #tpu.dot_dimension_numbers<[1], [0], [0], [1], [0, 0, 1, 1], [], []>} : vector<8x16xf32>, vector<16x32xf32>, vector<8x32xf32> -> vector<8x32xf32>
    %228 = vector.extract_strided_slice %227 {offsets = [0, 0], sizes = [8, 16], strides = [1, 1]} : vector<8x32xf32> to vector<8x16xf32>
    %229 = arith.mulf %228, %228 : vector<8x16xf32>
    %230 = tpu.concatenate %228, %229 in 1 : vector<8x16xf32>, vector<8x16xf32> -> vector<8x32xf32>
    %cst_89 = arith.constant dense<0.000000e+00> : vector<32xf32>
    %231 = vector.multi_reduction <add>, %230, %cst_89 [0] : vector<8x32xf32> to vector<32xf32>
    %232 = vector.shape_cast %231 : vector<32xf32> to vector<1x32xf32>
    %cst_90 = arith.constant 1.250000e-01 : f32
    %233 = vector.broadcast %cst_90 : f32 to vector<1x32xf32>
    %234 = arith.mulf %232, %233 : vector<1x32xf32>
    %235 = vector.extract_strided_slice %234 {offsets = [0, 0], sizes = [1, 16], strides = [1, 1]} : vector<1x32xf32> to vector<1x16xf32>
    %236 = vector.extract_strided_slice %234 {offsets = [0, 16], sizes = [1, 16], strides = [1, 1]} : vector<1x32xf32> to vector<1x16xf32>
    %237 = arith.mulf %235, %235 : vector<1x16xf32>
    %238 = arith.subf %236, %237 : vector<1x16xf32>
    %cst_91 = arith.constant 0.000000e+00 : f32
    %239 = vector.broadcast %cst_91 : f32 to vector<1x16xf32>
    %240 = arith.maximumf %238, %239 : vector<1x16xf32>
    %c15 = arith.constant 15 : index
    %c0_92 = arith.constant 0 : index
    %241 = vector.load %arg2[%c15, %c0_92] : memref<19x32xf32, #tpu.memory_space<vmem>>, vector<1x16xf32>
    %cst_93 = arith.constant 9.99999974E-6 : f32
    %242 = vector.broadcast %cst_93 : f32 to vector<1x16xf32>
    %243 = arith.addf %240, %242 : vector<1x16xf32>
    %244 = math.rsqrt %243 : vector<1x16xf32>
    %245 = arith.mulf %241, %244 : vector<1x16xf32>
    %246 = vector.broadcast %235 : vector<1x16xf32> to vector<8x16xf32>
    %247 = arith.subf %228, %246 : vector<8x16xf32>
    %248 = vector.broadcast %245 : vector<1x16xf32> to vector<8x16xf32>
    %249 = arith.mulf %247, %248 : vector<8x16xf32>
    %c16_94 = arith.constant 16 : index
    %c0_95 = arith.constant 0 : index
    %250 = vector.load %arg2[%c16_94, %c0_95] : memref<19x32xf32, #tpu.memory_space<vmem>>, vector<1x16xf32>
    %251 = vector.broadcast %250 : vector<1x16xf32> to vector<8x16xf32>
    %252 = arith.addf %249, %251 : vector<8x16xf32>
    %cst_96 = arith.constant 0.000000e+00 : f32
    %253 = vector.broadcast %cst_96 : f32 to vector<8x16xf32>
    %254 = arith.maximumf %252, %253 : vector<8x16xf32>
    %c9_97 = arith.constant 9 : index
    %c0_98 = arith.constant 0 : index
    %c0_99 = arith.constant 0 : index
    %255 = vector.load %arg1[%c9_97, %c0_98, %c0_99] : memref<10x16x32xf32, #tpu.memory_space<vmem>>, vector<1x16x32xf32>
    %256 = vector.shape_cast %255 : vector<1x16x32xf32> to vector<16x32xf32>
    %cst_100 = arith.constant dense<0.000000e+00> : vector<8x32xf32>
    %257 = tpu.matmul %254, %256, %cst_100 {dimension_numbers = #tpu.dot_dimension_numbers<[1], [0], [0], [1], [0, 0, 1, 1], [], []>} : vector<8x16xf32>, vector<16x32xf32>, vector<8x32xf32> -> vector<8x32xf32>
    %258 = vector.extract_strided_slice %257 {offsets = [0, 0], sizes = [8, 16], strides = [1, 1]} : vector<8x32xf32> to vector<8x16xf32>
    %259 = arith.mulf %258, %258 : vector<8x16xf32>
    %260 = tpu.concatenate %258, %259 in 1 : vector<8x16xf32>, vector<8x16xf32> -> vector<8x32xf32>
    %cst_101 = arith.constant dense<0.000000e+00> : vector<32xf32>
    %261 = vector.multi_reduction <add>, %260, %cst_101 [0] : vector<8x32xf32> to vector<32xf32>
    %262 = vector.shape_cast %261 : vector<32xf32> to vector<1x32xf32>
    %cst_102 = arith.constant 1.250000e-01 : f32
    %263 = vector.broadcast %cst_102 : f32 to vector<1x32xf32>
    %264 = arith.mulf %262, %263 : vector<1x32xf32>
    %265 = vector.extract_strided_slice %264 {offsets = [0, 0], sizes = [1, 16], strides = [1, 1]} : vector<1x32xf32> to vector<1x16xf32>
    %266 = vector.extract_strided_slice %264 {offsets = [0, 16], sizes = [1, 16], strides = [1, 1]} : vector<1x32xf32> to vector<1x16xf32>
    %267 = arith.mulf %265, %265 : vector<1x16xf32>
    %268 = arith.subf %266, %267 : vector<1x16xf32>
    %cst_103 = arith.constant 0.000000e+00 : f32
    %269 = vector.broadcast %cst_103 : f32 to vector<1x16xf32>
    %270 = arith.maximumf %268, %269 : vector<1x16xf32>
    %c17 = arith.constant 17 : index
    %c0_104 = arith.constant 0 : index
    %271 = vector.load %arg2[%c17, %c0_104] : memref<19x32xf32, #tpu.memory_space<vmem>>, vector<1x16xf32>
    %cst_105 = arith.constant 9.99999974E-6 : f32
    %272 = vector.broadcast %cst_105 : f32 to vector<1x16xf32>
    %273 = arith.addf %270, %272 : vector<1x16xf32>
    %274 = math.rsqrt %273 : vector<1x16xf32>
    %275 = arith.mulf %271, %274 : vector<1x16xf32>
    %276 = vector.broadcast %265 : vector<1x16xf32> to vector<8x16xf32>
    %277 = arith.subf %258, %276 : vector<8x16xf32>
    %278 = vector.broadcast %275 : vector<1x16xf32> to vector<8x16xf32>
    %279 = arith.mulf %277, %278 : vector<8x16xf32>
    %c18 = arith.constant 18 : index
    %c0_106 = arith.constant 0 : index
    %280 = vector.load %arg2[%c18, %c0_106] : memref<19x32xf32, #tpu.memory_space<vmem>>, vector<1x16xf32>
    %281 = vector.broadcast %280 : vector<1x16xf32> to vector<8x16xf32>
    %282 = arith.addf %279, %281 : vector<8x16xf32>
    %cst_107 = arith.constant 0.000000e+00 : f32
    %283 = vector.broadcast %cst_107 : f32 to vector<8x80xf32>
    %284 = tpu.concatenate %282, %127, %283 in 1 : vector<8x16xf32>, vector<8x32xf32>, vector<8x80xf32> -> vector<8x128xf32>
    %c0_108 = arith.constant 0 : index
    %c0_109 = arith.constant 0 : index
    %285 = vector.load %arg3[%c0_108, %c0_109] : memref<8x128xf32, #tpu.memory_space<vmem>>, vector<8x128xf32>
    tpu.vector_store %arg3[%c0_108, %c0_109], %284 {strides = array<i32>} : memref<8x128xf32, #tpu.memory_space<vmem>>, vector<8x128xf32>,
    return
  }
}

</mosaic_0001>

<llo_original>
// kernel: fwd.1
$region0: #{fwd.1}
  #allocation0 [shape = 'u32[]', space=smem, size = 0x4, offset = 0x4, fixed_abs, tag = 'smem constant byte address 0x4 - core index']
  #allocation1 [shape = 'u32[72,128]{1,0:T(1,128)}', space=vmem, size = 0x9000, scoped, tag = 'internal scratch']
  %s0 = inlined_call_operand.vmem [shape: f32[8,128], index: 0, kind: input, shape index: {}]
  %s1 = inlined_call_operand.hbm [shape: f32[10,16,32], index: 1, kind: input, shape index: {}]
  %s2 = inlined_call_operand.vmem [shape: f32[19,32], index: 2, kind: input, shape index: {}]
  %s3 = inlined_call_operand.vmem [shape: f32[8,128], index: 3, kind: output, shape index: {}]
  %s4 = sld [smem:[#allocation0]]
  $region26: #{fwd.1} parent=0
    _
  %s6 = ssub.s32 1, %s4
  %s7 = scalar_select 0, %s6, %s4
  $region1: #{fwd.1} parent=0
    #allocation2 [shape = 'u8[81920]{0}', space=vmem, size = 0x14000, scoped, tag = 'input window, operand 1, single buffered']
    #allocation3 [shape = 's32[1]{0}', space=sflag, size = 0x4, scoped, tag = 'scoped memory for fwd.1']
    %8 = vsyncpa [#allocation3], 0
    // Predicated region
    $region2: #{fwd.1} parent=1 // pred_check
      _
    $region3: #{fwd.1} parent=1 // pred_check_branch
      %10 = sbr.rel (0) target = $region5
    $region4: #{fwd.1} parent=1 // pred_region
      _
    $region5: #{fwd.1} parent=1 // pred_fallthru
      _
    // Predicated region
    $region6: #{fwd.1} parent=1 // pred_check
      _
    $region7: #{fwd.1} parent=1 // pred_check_branch
      %12 = sbr.rel (0) target = $region9
    $region8: #{fwd.1} parent=1 // pred_region
      %14 = vsyncadd [#allocation3], 0
      %s15 = sshll.u32 %s1, 4
      %s16 = int_to_ptr.hbm [resolvable:$true] %s15
      %s17 = sshll.u32 [#allocation2], 4
      %s18 = int_to_ptr.vmem [resolvable:$true] %s17
      %23 = dma.hbm_to_vmem [thread:$0]  %s16, 2560, %s18, [#allocation3], 128, 128, 8
    $region9: #{fwd.1} parent=1 // pred_fallthru
      _
    // Predicated region
    $region10: #{fwd.1} parent=1 // pred_check
      _
    $region11: #{fwd.1} parent=1 // pred_check_branch
      %25 = sbr.rel (0) target = $region13
    $region12: #{fwd.1} parent=1 // pred_region
      _
    $region13: #{fwd.1} parent=1 // pred_fallthru
      _
    // Predicated region
    $region14: #{fwd.1} parent=1 // pred_check
      _
    $region15: #{fwd.1} parent=1 // pred_check_branch
      %27 = sbr.rel (0) target = $region17
    $region16: #{fwd.1} parent=1 // pred_region
      %29 = dma.done [#allocation3], 2560
    $region17: #{fwd.1} parent=1 // pred_fallthru
      _
    %v30 = vld [vmem:[%s0] sm:$0xff]
    %v31 = vld [vmem:[#allocation2] sm:$0xff]
    %v32 = vld [vmem:[#allocation2 + $0x8] sm:$0xff]
    %vm33 = vcmask 130048
    %v35 = vsel %vm33, %v30, 0
    %37 = vmatpush.msra.mxu0 0.0
    %38 = vmatpush.msra.mxu0 0.0
    %39 = vmatpush.msra.mxu0 0.0
    %40 = vmatpush.msra.mxu0 0.0
    %41 = vmatpush.msra.mxu0 0.0
    %42 = vmatpush.msra.mxu0 0.0
    %43 = vmatpush.msra.mxu0 0.0
    %44 = vmatpush.msra.mxu0 0.0
    %45 = vmatpush.msra.mxu0 0.0
    %46 = vmatpush.msra.mxu0 0.0
    %47 = vmatpush.msra.mxu0 0.0
    %48 = vmatpush.msra.mxu0 0.0
    %49 = vmatpush.msra.mxu0 0.0
    %50 = vmatpush.msra.mxu0 0.0
    %51 = vmatpush.msra.mxu0 %v32
    %52 = vmatpush.msra.mxu0 %v31
    %53 = vmatmul.f32.gmra.mxu0 %v35
    %v54 = vpop.f32.mrf.mxu0
    %v55 = vadd.f32 0.0, %v54
    %56 = vdwg.mxu0
    %v57 = vmul.f32 %v55, %v55
    %59 = vrot.lane.b32.xlu0 %v57, 16
    %v60 = vpop.permute.xlu0 %59
    %v62 = vsel %vm33, %v55, %v60
    %vm63 = vcmask 261120
    %v64 = vsel %vm63, %v62, 0.0
    %v65 = vrot.slane %v64, 4
    %v66 = vadd.f32 %v64, %v65
    %v67 = vrot.slane %v66, 2
    %v68 = vadd.f32 %v66, %v67
    %v69 = vrot.slane %v68, 1
    %v70 = vadd.f32 %v68, %v69
    %v71 = vmul.f32 %v70, 0.125
    %v72 = vmul.f32 %v71, %v71
    %74 = vrot.lane.b32.xlu0 %v72, 16
    %v75 = vpop.permute.xlu0 %74
    %v77 = vsub.f32 %v71, %v75
    %v78 = vmax.f32 %v77, 0.0
    %v79 = vld [vmem:[%s2] sm:$0x1]
    %v80 = vadd.f32 %v78, 1e-05
    %v81 = vrsqrt.pop %v80
    %v82 = vmul.f32 %v81, %v80
    %v83 = vmul.f32 %v82, %v81
    %v84 = vmul.f32 0.5, %v83
    %v85 = vsub.f32 1.5, %v84
    %v86 = vmul.f32 %v81, %v85
    %vm87 = vweird.f32 %v80
    %vm88 = vweird.f32 %v81
    %vm89 = vmor %vm87, %vm88
    %v90 = vsel %vm89, %v81, %v86
    %92 = vrot.lane.b32.xlu0 %v90, 112
    %v93 = vpop.permute.xlu0 %92
    %v95 = vmul.f32 %v79, %v93
    %v96 = vsub.f32 %v55, %v71
    %v97 = vperm.slane %v95, 0
    %v98 = vmul.f32 %v96, %v97
    %v99 = vld [vmem:[%s2 + $0x1] sm:$0x1]
    %v100 = vperm.slane %v99, 0
    %v101 = vadd.f32 %v98, %v100
    %v102 = vmax.f32 %v101, 0.0
    %s103 = scalar_lea.vmem [#allocation2], 16
    %v104 = vld [vmem:[%s103] sm:$0xff]
    %v105 = vld [vmem:[%s103 + $0x8] sm:$0xff]
    %v107 = vsel %vm33, %v102, 0
    %109 = vmatpush.msra.mxu0 0.0
    %110 = vmatpush.msra.mxu0 0.0
    %111 = vmatpush.msra.mxu0 0.0
    %112 = vmatpush.msra.mxu0 0.0
    %113 = vmatpush.msra.mxu0 0.0
    %114 = vmatpush.msra.mxu0 0.0
    %115 = vmatpush.msra.mxu0 0.0
    %116 = vmatpush.msra.mxu0 0.0
    %117 = vmatpush.msra.mxu0 0.0
    %118 = vmatpush.msra.mxu0 0.0
    %119 = vmatpush.msra.mxu0 0.0
    %120 = vmatpush.msra.mxu0 0.0
    %121 = vmatpush.msra.mxu0 0.0
    %122 = vmatpush.msra.mxu0 0.0
    %123 = vmatpush.msra.mxu0 %v105
    %124 = vmatpush.msra.mxu0 %v104
    %125 = vmatmul.f32.gmra.mxu0 %v107
    %v126 = vpop.f32.mrf.mxu0
    %v127 = vadd.f32 0.0, %v126
    %128 = vdwg.mxu0
    %v129 = vmul.f32 %v127, %v127
    %131 = vrot.lane.b32.xlu0 %v129, 16
    %v132 = vpop.permute.xlu0 %131
    %v134 = vsel %vm33, %v127, %v132
    %v135 = vsel %vm63, %v134, 0.0
    %v136 = vrot.slane %v135, 4
    %v137 = vadd.f32 %v135, %v136
    %v138 = vrot.slane %v137, 2
    %v139 = vadd.f32 %v137, %v138
    %v140 = vrot.slane %v139, 1
    %v141 = vadd.f32 %v139, %v140
    %v142 = vmul.f32 %v141, 0.125
    %v143 = vmul.f32 %v142, %v142
    %145 = vrot.lane.b32.xlu0 %v143, 16
    %v146 = vpop.permute.xlu0 %145
    %v148 = vsub.f32 %v142, %v146
    %v149 = vmax.f32 %v148, 0.0
    %v150 = vld [vmem:[%s2 + $0x2] sm:$0x1]
    %v151 = vadd.f32 %v149, 1e-05
    %v152 = vrsqrt.pop %v151
    %v153 = vmul.f32 %v152, %v151
    %v154 = vmul.f32 %v153, %v152
    %v155 = vmul.f32 0.5, %v154
    %v156 = vsub.f32 1.5, %v155
    %v157 = vmul.f32 %v152, %v156
    %vm158 = vweird.f32 %v151
    %vm159 = vweird.f32 %v152
    %vm160 = vmor %vm158, %vm159
    %v161 = vsel %vm160, %v152, %v157
    %163 = vrot.lane.b32.xlu0 %v161, 112
    %v164 = vpop.permute.xlu0 %163
    %v166 = vmul.f32 %v150, %v164
    %v167 = vsub.f32 %v127, %v142
    %v168 = vperm.slane %v166, 0
    %v169 = vmul.f32 %v167, %v168
    %v170 = vld [vmem:[%s2 + $0x3] sm:$0x1]
    %v171 = vperm.slane %v170, 0
    %v172 = vadd.f32 %v169, %v171
    %v173 = vmax.f32 %v172, 0.0
    %s174 = scalar_lea.vmem [#allocation2], 32
    %v175 = vld [vmem:[%s174] sm:$0xff]
    %v176 = vld [vmem:[%s174 + $0x8] sm:$0xff]
    %v178 = vsel %vm33, %v173, 0
    %180 = vmatpush.msra.mxu0 0.0
    %181 = vmatpush.msra.mxu0 0.0
    %182 = vmatpush.msra.mxu0 0.0
    %183 = vmatpush.msra.mxu0 0.0
    %184 = vmatpush.msra.mxu0 0.0
    %185 = vmatpush.msra.mxu0 0.0
    %186 = vmatpush.msra.mxu0 0.0
    %187 = vmatpush.msra.mxu0 0.0
    %188 = vmatpush.msra.mxu0 0.0
    %189 = vmatpush.msra.mxu0 0.0
    %190 = vmatpush.msra.mxu0 0.0
    %191 = vmatpush.msra.mxu0 0.0
    %192 = vmatpush.msra.mxu0 0.0
    %193 = vmatpush.msra.mxu0 0.0
    %194 = vmatpush.msra.mxu0 %v176
    %195 = vmatpush.msra.mxu0 %v175
    %196 = vmatmul.f32.gmra.mxu0 %v178
    %v197 = vpop.f32.mrf.mxu0
    %v198 = vadd.f32 0.0, %v197
    %199 = vdwg.mxu0
    %v200 = vmul.f32 %v198, %v198
    %202 = vrot.lane.b32.xlu0 %v200, 16
    %v203 = vpop.permute.xlu0 %202
    %v205 = vsel %vm33, %v198, %v203
    %v206 = vsel %vm63, %v205, 0.0
    %v207 = vrot.slane %v206, 4
    %v208 = vadd.f32 %v206, %v207
    %v209 = vrot.slane %v208, 2
    %v210 = vadd.f32 %v208, %v209
    %v211 = vrot.slane %v210, 1
    %v212 = vadd.f32 %v210, %v211
    %v213 = vmul.f32 %v212, 0.125
    %v214 = vmul.f32 %v213, %v213
    %216 = vrot.lane.b32.xlu0 %v214, 16
    %v217 = vpop.permute.xlu0 %216
    %v219 = vsub.f32 %v213, %v217
    %v220 = vmax.f32 %v219, 0.0
    %v221 = vld [vmem:[%s2 + $0x4] sm:$0x1]
    %v222 = vadd.f32 %v220, 1e-05
    %v223 = vrsqrt.pop %v222
    %v224 = vmul.f32 %v223, %v222
    %v225 = vmul.f32 %v224, %v223
    %v226 = vmul.f32 0.5, %v225
    %v227 = vsub.f32 1.5, %v226
    %v228 = vmul.f32 %v223, %v227
    %vm229 = vweird.f32 %v222
    %vm230 = vweird.f32 %v223
    %vm231 = vmor %vm229, %vm230
    %v232 = vsel %vm231, %v223, %v228
    %234 = vrot.lane.b32.xlu0 %v232, 112
    %v235 = vpop.permute.xlu0 %234
    %v237 = vmul.f32 %v221, %v235
    %v238 = vsub.f32 %v198, %v213
    %v239 = vperm.slane %v237, 0
    %v240 = vmul.f32 %v238, %v239
    %v241 = vld [vmem:[%s2 + $0x5] sm:$0x1]
    %v242 = vperm.slane %v241, 0
    %v243 = vadd.f32 %v240, %v242
    %v244 = vmax.f32 %v243, 0.0
    %s245 = scalar_lea.vmem [#allocation2], 48
    %v246 = vld [vmem:[%s245] sm:$0xff]
    %v247 = vld [vmem:[%s245 + $0x8] sm:$0xff]
    %v249 = vsel %vm33, %v244, 0
    %251 = vmatpush.msra.mxu0 0.0
    %252 = vmatpush.msra.mxu0 0.0
    %253 = vmatpush.msra.mxu0 0.0
    %254 = vmatpush.msra.mxu0 0.0
    %255 = vmatpush.msra.mxu0 0.0
    %256 = vmatpush.msra.mxu0 0.0
    %257 = vmatpush.msra.mxu0 0.0
    %258 = vmatpush.msra.mxu0 0.0
    %259 = vmatpush.msra.mxu0 0.0
    %260 = vmatpush.msra.mxu0 0.0
    %261 = vmatpush.msra.mxu0 0.0
    %262 = vmatpush.msra.mxu0 0.0
    %263 = vmatpush.msra.mxu0 0.0
    %264 = vmatpush.msra.mxu0 0.0
    %265 = vmatpush.msra.mxu0 %v247
    %266 = vmatpush.msra.mxu0 %v246
    %267 = vmatmul.f32.gmra.mxu0 %v249
    %v268 = vpop.f32.mrf.mxu0
    %v269 = vadd.f32 0.0, %v268
    %270 = vdwg.mxu0
    %v271 = vmul.f32 %v269, %v269
    %273 = vrot.lane.b32.xlu0 %v271, 16
    %v274 = vpop.permute.xlu0 %273
    %v276 = vsel %vm33, %v269, %v274
    %v277 = vsel %vm63, %v276, 0.0
    %v278 = vrot.slane %v277, 4
    %v279 = vadd.f32 %v277, %v278
    %v280 = vrot.slane %v279, 2
    %v281 = vadd.f32 %v279, %v280
    %v282 = vrot.slane %v281, 1
    %v283 = vadd.f32 %v281, %v282
    %v284 = vmul.f32 %v283, 0.125
    %v285 = vmul.f32 %v284, %v284
    %287 = vrot.lane.b32.xlu0 %v285, 16
    %v288 = vpop.permute.xlu0 %287
    %v290 = vsub.f32 %v284, %v288
    %v291 = vmax.f32 %v290, 0.0
    %v292 = vld [vmem:[%s2 + $0x6] sm:$0x1]
    %v293 = vadd.f32 %v291, 1e-05
    %v294 = vrsqrt.pop %v293
    %v295 = vmul.f32 %v294, %v293
    %v296 = vmul.f32 %v295, %v294
    %v297 = vmul.f32 0.5, %v296
    %v298 = vsub.f32 1.5, %v297
    %v299 = vmul.f32 %v294, %v298
    %vm300 = vweird.f32 %v293
    %vm301 = vweird.f32 %v294
    %vm302 = vmor %vm300, %vm301
    %v303 = vsel %vm302, %v294, %v299
    %305 = vrot.lane.b32.xlu0 %v303, 112
    %v306 = vpop.permute.xlu0 %305
    %v308 = vmul.f32 %v292, %v306
    %v309 = vsub.f32 %v269, %v284
    %v310 = vperm.slane %v308, 0
    %v311 = vmul.f32 %v309, %v310
    %v312 = vld [vmem:[%s2 + $0x7] sm:$0x1]
    %v313 = vperm.slane %v312, 0
    %v314 = vadd.f32 %v311, %v313
    %v315 = vmax.f32 %v314, 0.0
    %s316 = scalar_lea.vmem [#allocation2], 64
    %v317 = vld [vmem:[%s316] sm:$0xff]
    %v318 = vld [vmem:[%s316 + $0x8] sm:$0xff]
    %v319 = vld [vmem:[%s2 + $0x8] sm:$0x1]
    %v320 = vperm.slane %v319, 0
    %v322 = vsel %vm33, %v315, 0
    %324 = vmatpush.msra.mxu0 0.0
    %325 = vmatpush.msra.mxu0 0.0
    %326 = vmatpush.msra.mxu0 0.0
    %327 = vmatpush.msra.mxu0 0.0
    %328 = vmatpush.msra.mxu0 0.0
    %329 = vmatpush.msra.mxu0 0.0
    %330 = vmatpush.msra.mxu0 0.0
    %331 = vmatpush.msra.mxu0 0.0
    %332 = vmatpush.msra.mxu0 0.0
    %333 = vmatpush.msra.mxu0 0.0
    %334 = vmatpush.msra.mxu0 0.0
    %335 = vmatpush.msra.mxu0 0.0
    %336 = vmatpush.msra.mxu0 0.0
    %337 = vmatpush.msra.mxu0 0.0
    %338 = vmatpush.msra.mxu0 %v318
    %339 = vmatpush.msra.mxu0 %v317
    %340 = vmatmul.f32.gmra.mxu0 %v322
    %v341 = vpop.f32.mrf.mxu0
    %v342 = vadd.f32 %v320, %v341
    %343 = vdwg.mxu0
    %v344 = vmul.f32 %v342, 0.5
    %v345 = vmul.f32 %v344, 1.442695
    %v346 = vpow.pop %v345
    %v347 = vmul.f32 %v30, %v346
    %349 = vrot.lane.b32.xlu0 %v342, 16
    %v350 = vpop.permute.xlu0 %349
    %v352 = vadd.f32 %v347, %v350
    %s353 = scalar_lea.vmem [#allocation2], 80
    %v354 = vld [vmem:[%s353] sm:$0xff]
    %v355 = vld [vmem:[%s353 + $0x8] sm:$0xff]
    %357 = vrot.lane.b32.xlu0 %v352, 112
    %v358 = vpop.permute.xlu0 %357
    %v359 = vsel %vm33, %v358, 0
    %361 = vmatpush.msra.mxu0 0.0
    %362 = vmatpush.msra.mxu0 0.0
    %363 = vmatpush.msra.mxu0 0.0
    %364 = vmatpush.msra.mxu0 0.0
    %365 = vmatpush.msra.mxu0 0.0
    %366 = vmatpush.msra.mxu0 0.0
    %367 = vmatpush.msra.mxu0 0.0
    %368 = vmatpush.msra.mxu0 0.0
    %369 = vmatpush.msra.mxu0 0.0
    %370 = vmatpush.msra.mxu0 0.0
    %371 = vmatpush.msra.mxu0 0.0
    %372 = vmatpush.msra.mxu0 0.0
    %373 = vmatpush.msra.mxu0 0.0
    %374 = vmatpush.msra.mxu0 0.0
    %375 = vmatpush.msra.mxu0 %v355
    %376 = vmatpush.msra.mxu0 %v354
    %377 = vmatmul.f32.gmra.mxu0 %v359
    %v378 = vpop.f32.mrf.mxu0
    %v379 = vadd.f32 0.0, %v378
    %380 = vdwg.mxu0
    %v381 = vmul.f32 %v379, %v379
    %383 = vrot.lane.b32.xlu0 %v381, 16
    %v384 = vpop.permute.xlu0 %383
    %v386 = vsel %vm33, %v379, %v384
    %v387 = vsel %vm63, %v386, 0.0
    %v388 = vrot.slane %v387, 4
    %v389 = vadd.f32 %v387, %v388
    %v390 = vrot.slane %v389, 2
    %v391 = vadd.f32 %v389, %v390
    %v392 = vrot.slane %v391, 1
    %v393 = vadd.f32 %v391, %v392
    %v394 = vmul.f32 %v393, 0.125
    %v395 = vmul.f32 %v394, %v394
    %397 = vrot.lane.b32.xlu0 %v395, 16
    %v398 = vpop.permute.xlu0 %397
    %v400 = vsub.f32 %v394, %v398
    %v401 = vmax.f32 %v400, 0.0
    %v402 = vld [vmem:[%s2 + $0x9] sm:$0x1]
    %v403 = vadd.f32 %v401, 1e-05
    %v404 = vrsqrt.pop %v403
    %v405 = vmul.f32 %v404, %v403
    %v406 = vmul.f32 %v405, %v404
    %v407 = vmul.f32 0.5, %v406
    %v408 = vsub.f32 1.5, %v407
    %v409 = vmul.f32 %v404, %v408
    %vm410 = vweird.f32 %v403
    %vm411 = vweird.f32 %v404
    %vm412 = vmor %vm410, %vm411
    %v413 = vsel %vm412, %v404, %v409
    %415 = vrot.lane.b32.xlu0 %v413, 112
    %v416 = vpop.permute.xlu0 %415
    %v418 = vmul.f32 %v402, %v416
    %v419 = vsub.f32 %v379, %v394
    %v420 = vperm.slane %v418, 0
    %v421 = vmul.f32 %v419, %v420
    %v422 = vld [vmem:[%s2 + $0xa] sm:$0x1]
    %v423 = vperm.slane %v422, 0
    %v424 = vadd.f32 %v421, %v423
    %v425 = vmax.f32 %v424, 0.0
    %s426 = scalar_lea.vmem [#allocation2], 96
    %v427 = vld [vmem:[%s426] sm:$0xff]
    %v428 = vld [vmem:[%s426 + $0x8] sm:$0xff]
    %v430 = vsel %vm33, %v425, 0
    %432 = vmatpush.msra.mxu0 0.0
    %433 = vmatpush.msra.mxu0 0.0
    %434 = vmatpush.msra.mxu0 0.0
    %435 = vmatpush.msra.mxu0 0.0
    %436 = vmatpush.msra.mxu0 0.0
    %437 = vmatpush.msra.mxu0 0.0
    %438 = vmatpush.msra.mxu0 0.0
    %439 = vmatpush.msra.mxu0 0.0
    %440 = vmatpush.msra.mxu0 0.0
    %441 = vmatpush.msra.mxu0 0.0
    %442 = vmatpush.msra.mxu0 0.0
    %443 = vmatpush.msra.mxu0 0.0
    %444 = vmatpush.msra.mxu0 0.0
    %445 = vmatpush.msra.mxu0 0.0
    %446 = vmatpush.msra.mxu0 %v428
    %447 = vmatpush.msra.mxu0 %v427
    %448 = vmatmul.f32.gmra.mxu0 %v430
    %v449 = vpop.f32.mrf.mxu0
    %v450 = vadd.f32 0.0, %v449
    %451 = vdwg.mxu0
    %v452 = vmul.f32 %v450, %v450
    %454 = vrot.lane.b32.xlu0 %v452, 16
    %v455 = vpop.permute.xlu0 %454
    %v457 = vsel %vm33, %v450, %v455
    %v458 = vsel %vm63, %v457, 0.0
    %v459 = vrot.slane %v458, 4
    %v460 = vadd.f32 %v458, %v459
    %v461 = vrot.slane %v460, 2
    %v462 = vadd.f32 %v460, %v461
    %v463 = vrot.slane %v462, 1
    %v464 = vadd.f32 %v462, %v463
    %v465 = vmul.f32 %v464, 0.125
    %v466 = vmul.f32 %v465, %v465
    %468 = vrot.lane.b32.xlu0 %v466, 16
    %v469 = vpop.permute.xlu0 %468
    %v471 = vsub.f32 %v465, %v469
    %v472 = vmax.f32 %v471, 0.0
    %v473 = vld [vmem:[%s2 + $0xb] sm:$0x1]
    %v474 = vadd.f32 %v472, 1e-05
    %v475 = vrsqrt.pop %v474
    %v476 = vmul.f32 %v475, %v474
    %v477 = vmul.f32 %v476, %v475
    %v478 = vmul.f32 0.5, %v477
    %v479 = vsub.f32 1.5, %v478
    %v480 = vmul.f32 %v475, %v479
    %vm481 = vweird.f32 %v474
    %vm482 = vweird.f32 %v475
    %vm483 = vmor %vm481, %vm482
    %v484 = vsel %vm483, %v475, %v480
    %486 = vrot.lane.b32.xlu0 %v484, 112
    %v487 = vpop.permute.xlu0 %486
    %v489 = vmul.f32 %v473, %v487
    %v490 = vsub.f32 %v450, %v465
    %v491 = vperm.slane %v489, 0
    %v492 = vmul.f32 %v490, %v491
    %v493 = vld [vmem:[%s2 + $0xc] sm:$0x1]
    %v494 = vperm.slane %v493, 0
    %v495 = vadd.f32 %v492, %v494
    %v496 = vmax.f32 %v495, 0.0
    %s497 = scalar_lea.vmem [#allocation2], 112
    %v498 = vld [vmem:[%s497] sm:$0xff]
    %v499 = vld [vmem:[%s497 + $0x8] sm:$0xff]
    %v501 = vsel %vm33, %v496, 0
    %503 = vmatpush.msra.mxu0 0.0
    %504 = vmatpush.msra.mxu0 0.0
    %505 = vmatpush.msra.mxu0 0.0
    %506 = vmatpush.msra.mxu0 0.0
    %507 = vmatpush.msra.mxu0 0.0
    %508 = vmatpush.msra.mxu0 0.0
    %509 = vmatpush.msra.mxu0 0.0
    %510 = vmatpush.msra.mxu0 0.0
    %511 = vmatpush.msra.mxu0 0.0
    %512 = vmatpush.msra.mxu0 0.0
    %513 = vmatpush.msra.mxu0 0.0
    %514 = vmatpush.msra.mxu0 0.0
    %515 = vmatpush.msra.mxu0 0.0
    %516 = vmatpush.msra.mxu0 0.0
    %517 = vmatpush.msra.mxu0 %v499
    %518 = vmatpush.msra.mxu0 %v498
    %519 = vmatmul.f32.gmra.mxu0 %v501
    %v520 = vpop.f32.mrf.mxu0
    %v521 = vadd.f32 0.0, %v520
    %522 = vdwg.mxu0
    %v523 = vmul.f32 %v521, %v521
    %525 = vrot.lane.b32.xlu0 %v523, 16
    %v526 = vpop.permute.xlu0 %525
    %v528 = vsel %vm33, %v521, %v526
    %v529 = vsel %vm63, %v528, 0.0
    %v530 = vrot.slane %v529, 4
    %v531 = vadd.f32 %v529, %v530
    %v532 = vrot.slane %v531, 2
    %v533 = vadd.f32 %v531, %v532
    %v534 = vrot.slane %v533, 1
    %v535 = vadd.f32 %v533, %v534
    %v536 = vmul.f32 %v535, 0.125
    %v537 = vmul.f32 %v536, %v536
    %539 = vrot.lane.b32.xlu0 %v537, 16
    %v540 = vpop.permute.xlu0 %539
    %v542 = vsub.f32 %v536, %v540
    %v543 = vmax.f32 %v542, 0.0
    %v544 = vld [vmem:[%s2 + $0xd] sm:$0x1]
    %v545 = vadd.f32 %v543, 1e-05
    %v546 = vrsqrt.pop %v545
    %v547 = vmul.f32 %v546, %v545
    %v548 = vmul.f32 %v547, %v546
    %v549 = vmul.f32 0.5, %v548
    %v550 = vsub.f32 1.5, %v549
    %v551 = vmul.f32 %v546, %v550
    %vm552 = vweird.f32 %v545
    %vm553 = vweird.f32 %v546
    %vm554 = vmor %vm552, %vm553
    %v555 = vsel %vm554, %v546, %v551
    %557 = vrot.lane.b32.xlu0 %v555, 112
    %v558 = vpop.permute.xlu0 %557
    %v560 = vmul.f32 %v544, %v558
    %v561 = vsub.f32 %v521, %v536
    %v562 = vperm.slane %v560, 0
    %v563 = vmul.f32 %v561, %v562
    %v564 = vld [vmem:[%s2 + $0xe] sm:$0x1]
    %v565 = vperm.slane %v564, 0
    %v566 = vadd.f32 %v563, %v565
    %v567 = vmax.f32 %v566, 0.0
    %s568 = scalar_lea.vmem [#allocation2], 128
    %v569 = vld [vmem:[%s568] sm:$0xff]
    %v570 = vld [vmem:[%s568 + $0x8] sm:$0xff]
    %v572 = vsel %vm33, %v567, 0
    %574 = vmatpush.msra.mxu0 0.0
    %575 = vmatpush.msra.mxu0 0.0
    %576 = vmatpush.msra.mxu0 0.0
    %577 = vmatpush.msra.mxu0 0.0
    %578 = vmatpush.msra.mxu0 0.0
    %579 = vmatpush.msra.mxu0 0.0
    %580 = vmatpush.msra.mxu0 0.0
    %581 = vmatpush.msra.mxu0 0.0
    %582 = vmatpush.msra.mxu0 0.0
    %583 = vmatpush.msra.mxu0 0.0
    %584 = vmatpush.msra.mxu0 0.0
    %585 = vmatpush.msra.mxu0 0.0
    %586 = vmatpush.msra.mxu0 0.0
    %587 = vmatpush.msra.mxu0 0.0
    %588 = vmatpush.msra.mxu0 %v570
    %589 = vmatpush.msra.mxu0 %v569
    %590 = vmatmul.f32.gmra.mxu0 %v572
    %v591 = vpop.f32.mrf.mxu0
    %v592 = vadd.f32 0.0, %v591
    %593 = vdwg.mxu0
    %v594 = vmul.f32 %v592, %v592
    %596 = vrot.lane.b32.xlu0 %v594, 16
    %v597 = vpop.permute.xlu0 %596
    %v599 = vsel %vm33, %v592, %v597
    %v600 = vsel %vm63, %v599, 0.0
    %v601 = vrot.slane %v600, 4
    %v602 = vadd.f32 %v600, %v601
    %v603 = vrot.slane %v602, 2
    %v604 = vadd.f32 %v602, %v603
    %v605 = vrot.slane %v604, 1
    %v606 = vadd.f32 %v604, %v605
    %v607 = vmul.f32 %v606, 0.125
    %v608 = vmul.f32 %v607, %v607
    %610 = vrot.lane.b32.xlu0 %v608, 16
    %v611 = vpop.permute.xlu0 %610
    %v613 = vsub.f32 %v607, %v611
    %v614 = vmax.f32 %v613, 0.0
    %v615 = vld [vmem:[%s2 + $0xf] sm:$0x1]
    %v616 = vadd.f32 %v614, 1e-05
    %v617 = vrsqrt.pop %v616
    %v618 = vmul.f32 %v617, %v616
    %v619 = vmul.f32 %v618, %v617
    %v620 = vmul.f32 0.5, %v619
    %v621 = vsub.f32 1.5, %v620
    %v622 = vmul.f32 %v617, %v621
    %vm623 = vweird.f32 %v616
    %vm624 = vweird.f32 %v617
    %vm625 = vmor %vm623, %vm624
    %v626 = vsel %vm625, %v617, %v622
    %628 = vrot.lane.b32.xlu0 %v626, 112
    %v629 = vpop.permute.xlu0 %628
    %v631 = vmul.f32 %v615, %v629
    %v632 = vsub.f32 %v592, %v607
    %v633 = vperm.slane %v631, 0
    %v634 = vmul.f32 %v632, %v633
    %v635 = vld [vmem:[%s2 + $0x10] sm:$0x1]
    %v636 = vperm.slane %v635, 0
    %v637 = vadd.f32 %v634, %v636
    %v638 = vmax.f32 %v637, 0.0
    %s639 = scalar_lea.vmem [#allocation2], 144
    %v640 = vld [vmem:[%s639] sm:$0xff]
    %v641 = vld [vmem:[%s639 + $0x8] sm:$0xff]
    %v643 = vsel %vm33, %v638, 0
    %645 = vmatpush.msra.mxu0 0.0
    %646 = vmatpush.msra.mxu0 0.0
    %647 = vmatpush.msra.mxu0 0.0
    %648 = vmatpush.msra.mxu0 0.0
    %649 = vmatpush.msra.mxu0 0.0
    %650 = vmatpush.msra.mxu0 0.0
    %651 = vmatpush.msra.mxu0 0.0
    %652 = vmatpush.msra.mxu0 0.0
    %653 = vmatpush.msra.mxu0 0.0
    %654 = vmatpush.msra.mxu0 0.0
    %655 = vmatpush.msra.mxu0 0.0
    %656 = vmatpush.msra.mxu0 0.0
    %657 = vmatpush.msra.mxu0 0.0
    %658 = vmatpush.msra.mxu0 0.0
    %659 = vmatpush.msra.mxu0 %v641
    %660 = vmatpush.msra.mxu0 %v640
    %661 = vmatmul.f32.gmra.mxu0 %v643
    %v662 = vpop.f32.mrf.mxu0
    %v663 = vadd.f32 0.0, %v662
    %664 = vdwg.mxu0
    %v665 = vmul.f32 %v663, %v663
    %667 = vrot.lane.b32.xlu0 %v665, 16
    %v668 = vpop.permute.xlu0 %667
    %v670 = vsel %vm33, %v663, %v668
    %v671 = vsel %vm63, %v670, 0.0
    %v672 = vrot.slane %v671, 4
    %v673 = vadd.f32 %v671, %v672
    %v674 = vrot.slane %v673, 2
    %v675 = vadd.f32 %v673, %v674
    %v676 = vrot.slane %v675, 1
    %v677 = vadd.f32 %v675, %v676
    %v678 = vmul.f32 %v677, 0.125
    %v679 = vmul.f32 %v678, %v678
    %681 = vrot.lane.b32.xlu0 %v679, 16
    %v682 = vpop.permute.xlu0 %681
    %v684 = vsub.f32 %v678, %v682
    %v685 = vmax.f32 %v684, 0.0
    %v686 = vld [vmem:[%s2 + $0x11] sm:$0x1]
    %v687 = vadd.f32 %v685, 1e-05
    %v688 = vrsqrt.pop %v687
    %v689 = vmul.f32 %v688, %v687
    %v690 = vmul.f32 %v689, %v688
    %v691 = vmul.f32 0.5, %v690
    %v692 = vsub.f32 1.5, %v691
    %v693 = vmul.f32 %v688, %v692
    %vm694 = vweird.f32 %v687
    %vm695 = vweird.f32 %v688
    %vm696 = vmor %vm694, %vm695
    %v697 = vsel %vm696, %v688, %v693
    %699 = vrot.lane.b32.xlu0 %v697, 112
    %v700 = vpop.permute.xlu0 %699
    %v702 = vmul.f32 %v686, %v700
    %v703 = vsub.f32 %v663, %v678
    %v704 = vperm.slane %v702, 0
    %v705 = vmul.f32 %v703, %v704
    %v706 = vld [vmem:[%s2 + $0x12] sm:$0x1]
    %v707 = vperm.slane %v706, 0
    %v708 = vadd.f32 %v705, %v707
    %v709 = vsel %vm33, %v708, %v350
    %vm710 = vcmask 392192
    %v711 = vsel %vm710, %v709, 0.0
    %712 = vst [vmem:[%s3] sm:$0xff] %v711
    // Predicated region
    $region18: #{fwd.1} parent=1 // pred_check
      _
    $region19: #{fwd.1} parent=1 // pred_check_branch
      %714 = sbr.rel (0) target = $region21
    $region20: #{fwd.1} parent=1 // pred_region
      _
    $region21: #{fwd.1} parent=1 // pred_fallthru
      _
    // Predicated region
    $region22: #{fwd.1} parent=1 // pred_check
      _
    $region23: #{fwd.1} parent=1 // pred_check_branch
      %716 = sbr.rel (0) target = $region25
    $region24: #{fwd.1} parent=1 // pred_region
      _
    $region25: #{fwd.1} parent=1 // pred_fallthru
      _
    %717 = vsyncpa [#allocation3], 1

</llo_original>
